<compile_context>
chip_gen: v6e
topology: v6e:2x2x1
jax: 0.10.0
libtpu: 0.0.40
codegen_flags: <defaults>
</compile_context>

<pallas_src>
import jax
import jax.numpy as jnp
from jax.experimental import pallas as pl
from jax.experimental.pallas import tpu as pltpu

LANE = 128
SUBLANE = 8


def _round_up(x, m):
    return ((x + m - 1) // m) * m


def _qmodel_kernel(x_ref, w1_ref, b1_ref, w2_ref, b2_ref, q_ref):
    """Fused 2-layer MLP Q-head: q = tanh(x@W1 + b1) @ W2 + b2.

    x/W1/W2 arrive as bf16 (native MXU path, f32 accumulation); bias add and
    tanh run in f32 on the VPU/EUP.  The output tile is lane-dense (N padded
    to 128) so the final store is an unmasked vst.
    """
    h = jnp.dot(x_ref[...], w1_ref[...], preferred_element_type=jnp.float32)
    h = jnp.tanh(h + b1_ref[...])
    q = jnp.dot(h.astype(w2_ref.dtype), w2_ref[...],
                preferred_element_type=jnp.float32)
    q_ref[...] = (q + b2_ref[...]).astype(q_ref.dtype)


def qmodel_forward(x, params, state, *, batch_tile=256):
    """Pallas-backed forward: returns (q_values, state) like BaseQModel subclasses."""
    w1, b1, w2, b2 = params
    batch, obs_dim = x.shape
    hidden = w1.shape[1]
    num_actions = w2.shape[1]

    # ---- lane-dense output: pad N (num_actions) up to a multiple of 128 ----
    n_pad = _round_up(max(num_actions, LANE), LANE)
    w2_p = jnp.zeros((hidden, n_pad), jnp.float32).at[:, :num_actions].set(
        w2.astype(jnp.float32))
    b2_p = jnp.zeros((1, n_pad), jnp.float32).at[:, :num_actions].set(
        b2.astype(jnp.float32))

    # ---- batch grid: pad batch to a multiple of the batch tile ----
    tb = min(batch_tile, _round_up(batch, SUBLANE))
    b_pad = _round_up(batch, tb)
    x_p = x
    if b_pad != batch:
        x_p = jnp.zeros((b_pad, obs_dim), x.dtype).at[:batch].set(x)
    grid = (b_pad // tb,)

    # bf16 operands for the MXU; biases stay f32.
    x_bf = x_p.astype(jnp.bfloat16)
    w1_bf = w1.astype(jnp.bfloat16)
    w2_bf = w2_p.astype(jnp.bfloat16)
    b1_f = b1.astype(jnp.float32)

    cost = pl.CostEstimate(
        flops=2 * b_pad * (obs_dim * hidden + hidden * n_pad),
        transcendentals=b_pad * hidden,
        bytes_accessed=(x_bf.size * 2 + w1_bf.size * 2 + w2_bf.size * 2
                        + b1_f.size * 4 + b2_p.size * 4 + b_pad * n_pad * 4),
    )

    q_pad = pl.pallas_call(
        _qmodel_kernel,
        out_shape=jax.ShapeDtypeStruct((b_pad, n_pad), jnp.float32),
        grid_spec=pltpu.PrefetchScalarGridSpec(
            num_scalar_prefetch=0,
            grid=grid,
            in_specs=[
                # activations: streamed over the batch grid axis
                pl.BlockSpec((tb, obs_dim), lambda i: (i, 0)),
                # weights / biases: constant block index -> resident in VMEM
                pl.BlockSpec((obs_dim, hidden), lambda i: (0, 0)),
                pl.BlockSpec((1, hidden), lambda i: (0, 0)),
                pl.BlockSpec((hidden, n_pad), lambda i: (0, 0)),
                pl.BlockSpec((1, n_pad), lambda i: (0, 0)),
            ],
            out_specs=pl.BlockSpec((tb, n_pad), lambda i: (i, 0)),
        ),
        compiler_params=pltpu.CompilerParams(
            # batch axis is independent -> shard across v7x's 2 TCs; no-op on
            # single-TC v5e/v6e.  (VMEM use here is tiny: tb*(obs+128) tiles
            # plus resident weights fit far under the 32 MiB scoped default.)
            dimension_semantics=("parallel",),
        ),
        cost_estimate=cost,
    )(x_bf, w1_bf, b1_f, w2_bf, b2_p)

    # Slice padded batch / padded N back to the logical Q-value table.
    q = q_pad[:batch, :num_actions]

    # TODO(synk): BaseQModel.forward itself is abstract (raises NotImplementedError)
    # and .cuda()/.cpu() are device bookkeeping with no kernel equivalent; the
    # state tuple is passed through untouched as in the feed-forward subclasses.
    return q, state


def init_params(key, obs_dim, hidden, num_actions):
    k1, k2, k3, k4 = jax.random.split(key, 4)
    w1 = jax.random.normal(k1, (obs_dim, hidden), jnp.float32) * (1.0 / jnp.sqrt(obs_dim))
    b1 = jax.random.normal(k2, (1, hidden), jnp.float32) * 0.01
    w2 = jax.random.normal(k3, (hidden, num_actions), jnp.float32) * (1.0 / jnp.sqrt(hidden))
    b2 = jax.random.normal(k4, (1, num_actions), jnp.float32) * 0.01
    return (w1, b1, w2, b2)


if __name__ == "__main__":
    # Discrete(num_actions) action space, flat observation vector.
    batch, obs_dim, hidden, num_actions = 8, 16, 32, 5

    key = jax.random.PRNGKey(0)
    kx, kp = jax.random.split(key)
    x = jax.random.normal(kx, (batch, obs_dim), jnp.float32)
    params = init_params(kp, obs_dim, hidden, num_actions)
    state = ()  # feed-forward Q model: empty recurrent state

    q, new_state = qmodel_forward(x, params, state)
    q = jax.block_until_ready(q)

    # Reference check mirroring the kernel's bf16-operand / f32-accumulate path.
    w1, b1, w2, b2 = params
    x_bf, w1_bf, w2_bf = (a.astype(jnp.bfloat16) for a in (x, w1, w2))
    h_ref = jnp.tanh(jnp.dot(x_bf, w1_bf, preferred_element_type=jnp.float32) + b1)
    q_ref_bf = jnp.dot(h_ref.astype(jnp.bfloat16), w2_bf,
                       preferred_element_type=jnp.float32) + b2
    # Pure-f32 semantic reference (looser tolerance, bf16 operand rounding).
    q_ref_f32 = jnp.tanh(x @ w1 + b1) @ w2 + b2

    assert q.shape == (batch, num_actions)
    assert jnp.allclose(q, q_ref_bf, atol=1e-3, rtol=1e-3)
    assert jnp.allclose(q, q_ref_f32, atol=5e-2, rtol=5e-2)
    assert new_state == state

    print("KERNEL_OK")
</pallas_src>

<mosaic_0001>
module attributes {stable_mosaic.version = 11 : i64} {
  func.func @_qmodel_kernel(%arg0: i32, %arg1: memref<8x16xbf16, #tpu.memory_space<vmem>>, %arg2: memref<16x32xbf16, #tpu.memory_space<vmem>>, %arg3: memref<1x32xf32, #tpu.memory_space<vmem>>, %arg4: memref<32x128xbf16, #tpu.memory_space<vmem>>, %arg5: memref<1x128xf32, #tpu.memory_space<vmem>>, %arg6: memref<8x128xf32, #tpu.memory_space<vmem>>) attributes {dimension_semantics = [#tpu.dimension_semantics<parallel>], iteration_bounds = array<i64: 1>, scalar_prefetch = 0 : i64, scratch_operands = 0 : i64, tpu.core_type = #tpu.core_type<tc>, window_params = [{transform_indices = @transform_0, window_bounds = array<i64: 8, 16>}, {pipeline_mode = #tpu.pipeline_mode<synchronous>, transform_indices = @transform_1, window_bounds = array<i64: 16, 32>}, {pipeline_mode = #tpu.pipeline_mode<synchronous>, transform_indices = @transform_2, window_bounds = array<i64: 1, 32>}, {pipeline_mode = #tpu.pipeline_mode<synchronous>, transform_indices = @transform_3, window_bounds = array<i64: 32, 128>}, {pipeline_mode = #tpu.pipeline_mode<synchronous>, transform_indices = @transform_4, window_bounds = array<i64: 1, 128>}, {transform_indices = @transform_5, window_bounds = array<i64: 8, 128>}]} {
    %c0 = arith.constant 0 : index
    %c0_0 = arith.constant 0 : index
    %0 = vector.load %arg1[%c0, %c0_0] : memref<8x16xbf16, #tpu.memory_space<vmem>>, vector<8x16xbf16>
    %c0_1 = arith.constant 0 : index
    %c0_2 = arith.constant 0 : index
    %1 = vector.load %arg2[%c0_1, %c0_2] : memref<16x32xbf16, #tpu.memory_space<vmem>>, vector<16x32xbf16>
    %cst = arith.constant dense<0.000000e+00> : vector<8x32xf32>
    %2 = tpu.matmul %0, %1, %cst {dimension_numbers = #tpu.dot_dimension_numbers<[1], [0], [0], [1], [0, 0, 1, 1], [], []>} : vector<8x16xbf16>, vector<16x32xbf16>, vector<8x32xf32> -> vector<8x32xf32>
    %c0_3 = arith.constant 0 : index
    %c0_4 = arith.constant 0 : index
    %3 = vector.load %arg3[%c0_3, %c0_4] : memref<1x32xf32, #tpu.memory_space<vmem>>, vector<1x32xf32>
    %4 = vector.broadcast %3 : vector<1x32xf32> to vector<8x32xf32>
    %5 = arith.addf %2, %4 : vector<8x32xf32>
    %6 = math.tanh %5 : vector<8x32xf32>
    %7 = arith.truncf %6 : vector<8x32xf32> to vector<8x32xbf16>
    %c0_5 = arith.constant 0 : index
    %c0_6 = arith.constant 0 : index
    %8 = vector.load %arg4[%c0_5, %c0_6] : memref<32x128xbf16, #tpu.memory_space<vmem>>, vector<32x128xbf16>
    %cst_7 = arith.constant dense<0.000000e+00> : vector<8x128xf32>
    %9 = tpu.matmul %7, %8, %cst_7 {dimension_numbers = #tpu.dot_dimension_numbers<[1], [0], [0], [1], [0, 0, 1, 1], [], []>} : vector<8x32xbf16>, vector<32x128xbf16>, vector<8x128xf32> -> vector<8x128xf32>
    %c0_8 = arith.constant 0 : index
    %c0_9 = arith.constant 0 : index
    %10 = vector.load %arg5[%c0_8, %c0_9] : memref<1x128xf32, #tpu.memory_space<vmem>>, vector<1x128xf32>
    %11 = vector.broadcast %10 : vector<1x128xf32> to vector<8x128xf32>
    %12 = arith.addf %9, %11 : vector<8x128xf32>
    %c0_10 = arith.constant 0 : index
    %c0_11 = arith.constant 0 : index
    %13 = vector.load %arg6[%c0_10, %c0_11] : memref<8x128xf32, #tpu.memory_space<vmem>>, vector<8x128xf32>
    tpu.vector_store %arg6[%c0_10, %c0_11], %12 {strides = array<i32>} : memref<8x128xf32, #tpu.memory_space<vmem>>, vector<8x128xf32>,
    return
  }
  func.func @transform_0(%arg0: i32) -> (i32, i32) {
    %c0_i32 = arith.constant 0 : i32
    %c0_i32_0 = arith.constant 0 : i32
    return %arg0, %c0_i32 : i32, i32
  }
  func.func @transform_1(%arg0: i32) -> (i32, i32) {
    %c0_i32 = arith.constant 0 : i32
    %c0_i32_0 = arith.constant 0 : i32
    %c0_i32_1 = arith.constant 0 : i32
    return %c0_i32, %c0_i32_0 : i32, i32
  }
  func.func @transform_2(%arg0: i32) -> (i32, i32) {
    %c0_i32 = arith.constant 0 : i32
    %c0_i32_0 = arith.constant 0 : i32
    %c0_i32_1 = arith.constant 0 : i32
    return %c0_i32, %c0_i32_0 : i32, i32
  }
  func.func @transform_3(%arg0: i32) -> (i32, i32) {
    %c0_i32 = arith.constant 0 : i32
    %c0_i32_0 = arith.constant 0 : i32
    %c0_i32_1 = arith.constant 0 : i32
    return %c0_i32, %c0_i32_0 : i32, i32
  }
  func.func @transform_4(%arg0: i32) -> (i32, i32) {
    %c0_i32 = arith.constant 0 : i32
    %c0_i32_0 = arith.constant 0 : i32
    %c0_i32_1 = arith.constant 0 : i32
    return %c0_i32, %c0_i32_0 : i32, i32
  }
  func.func @transform_5(%arg0: i32) -> (i32, i32) {
    %c0_i32 = arith.constant 0 : i32
    %c0_i32_0 = arith.constant 0 : i32
    return %arg0, %c0_i32 : i32, i32
  }
}

</mosaic_0001>

<llo_original>
// kernel: tpu_custom_call.1
$region0: #{tpu_custom_call.1}
  #allocation0 [shape = 'u32[]', space=smem, size = 0x4, offset = 0x4, fixed_abs, tag = 'smem constant byte address 0x4 - core index']
  #allocation1 [shape = 'u32[144,128]{1,0:T(1,128)}', space=vmem, size = 0x12000, scoped, tag = 'internal scratch']
  %s0 = inlined_call_operand.hbm [shape: bf16[8,16], index: 0, kind: input, shape index: {}]
  %s1 = inlined_call_operand.hbm [shape: bf16[16,32], index: 1, kind: input, shape index: {}]
  %s2 = inlined_call_operand.vmem [shape: f32[1,32], index: 2, kind: input, shape index: {}]
  %s3 = inlined_call_operand.hbm [shape: bf16[32,128], index: 3, kind: input, shape index: {}]
  %s4 = inlined_call_operand.vmem [shape: f32[1,128], index: 4, kind: input, shape index: {}]
  %s5 = inlined_call_operand.hbm [shape: f32[8,128], index: 5, kind: output, shape index: {}]
  %s6 = sld [smem:[#allocation0]]
  $region42: #{tpu_custom_call.1} parent=0
    _
  %s8 = ssub.s32 1, %s6
  %s9 = scalar_select 0, %s8, %s6
  $region1: #{tpu_custom_call.1} parent=0
    #allocation2 [shape = 'u8[2048]{0}', space=vmem, size = 0x800, scoped, tag = 'input window, operand 0, single buffered']
    #allocation3 [shape = 's32[1]{0}', space=sflag, size = 0x4, scoped, tag = 'scoped memory for tpu_custom_call.1']
    #allocation4 [shape = 's32[1]{0}', space=sflag, size = 0x4, scoped, tag = 'scoped memory for tpu_custom_call.1']
    #allocation5 [shape = 'u8[4096]{0}', space=vmem, size = 0x1000, scoped, tag = 'input window, operand 1, single buffered']
    #allocation6 [shape = 's32[1]{0}', space=sflag, size = 0x4, scoped, tag = 'scoped memory for tpu_custom_call.1']
    #allocation7 [shape = 'u8[8192]{0}', space=vmem, size = 0x2000, scoped, tag = 'input window, operand 3, single buffered']
    #allocation8 [shape = 'u8[4096]{0}', space=vmem, size = 0x1000, scoped, tag = 'output window, operand 0, single buffered']
    %10 = vsyncpa [#allocation3], 0
    %11 = vsyncpa [#allocation6], 0
    %12 = vsyncpa [#allocation4], 0
    // Predicated region
    $region2: #{tpu_custom_call.1} parent=1 // pred_check
      _
    $region3: #{tpu_custom_call.1} parent=1 // pred_check_branch
      %14 = sbr.rel (0) target = $region5
    $region4: #{tpu_custom_call.1} parent=1 // pred_region
      %s16 = ssub.s32 64, 64
      %17 = vsyncadd [#allocation3], %s16
      %s19 = sshll.u32 [#allocation2], 4
      %s20 = int_to_ptr.vmem [resolvable:$true] %s19
      %22 = dma.hbm_to_vmem [thread:$0]  %s0, 64, %s20, [#allocation3]
    $region5: #{tpu_custom_call.1} parent=1 // pred_fallthru
      _
    // Predicated region
    $region6: #{tpu_custom_call.1} parent=1 // pred_check
      _
    $region7: #{tpu_custom_call.1} parent=1 // pred_check_branch
      %24 = sbr.rel (0) target = $region9
    $region8: #{tpu_custom_call.1} parent=1 // pred_region
      %s26 = ssub.s32 128, 128
      %27 = vsyncadd [#allocation6], %s26
      %s28 = sshll.u32 [#allocation5], 4
      %s29 = int_to_ptr.vmem [resolvable:$true] %s28
      %34 = dma.hbm_to_vmem [thread:$0]  %s1, 128, %s29, [#allocation6], 64, 64, 4
    $region9: #{tpu_custom_call.1} parent=1 // pred_fallthru
      _
    // Predicated region
    $region10: #{tpu_custom_call.1} parent=1 // pred_check
      _
    $region11: #{tpu_custom_call.1} parent=1 // pred_check_branch
      %36 = sbr.rel (0) target = $region13
    $region12: #{tpu_custom_call.1} parent=1 // pred_region
      _
    $region13: #{tpu_custom_call.1} parent=1 // pred_fallthru
      _
    // Predicated region
    $region14: #{tpu_custom_call.1} parent=1 // pred_check
      _
    $region15: #{tpu_custom_call.1} parent=1 // pred_check_branch
      %38 = sbr.rel (0) target = $region17
    $region16: #{tpu_custom_call.1} parent=1 // pred_region
      %s40 = ssub.s32 256, 256
      %41 = vsyncadd [#allocation6], %s40
      %s42 = sshll.u32 [#allocation7], 4
      %s43 = int_to_ptr.vmem [resolvable:$true] %s42
      %48 = dma.hbm_to_vmem [thread:$0]  %s3, 256, %s43, [#allocation6], 64, 64, 4
    $region17: #{tpu_custom_call.1} parent=1 // pred_fallthru
      _
    // Predicated region
    $region18: #{tpu_custom_call.1} parent=1 // pred_check
      _
    $region19: #{tpu_custom_call.1} parent=1 // pred_check_branch
      %50 = sbr.rel (0) target = $region21
    $region20: #{tpu_custom_call.1} parent=1 // pred_region
      _
    $region21: #{tpu_custom_call.1} parent=1 // pred_fallthru
      _
    // Predicated region
    $region22: #{tpu_custom_call.1} parent=1 // pred_check
      _
    $region23: #{tpu_custom_call.1} parent=1 // pred_check_branch
      %52 = sbr.rel (0) target = $region25
    $region24: #{tpu_custom_call.1} parent=1 // pred_region
      %53 = dma.done [#allocation3], 64
    $region25: #{tpu_custom_call.1} parent=1 // pred_fallthru
      _
    // Predicated region
    $region26: #{tpu_custom_call.1} parent=1 // pred_check
      _
    $region27: #{tpu_custom_call.1} parent=1 // pred_check_branch
      %55 = sbr.rel (0) target = $region29
    $region28: #{tpu_custom_call.1} parent=1 // pred_region
      %56 = dma.done [#allocation6], 128
    $region29: #{tpu_custom_call.1} parent=1 // pred_fallthru
      _
    // Predicated region
    $region30: #{tpu_custom_call.1} parent=1 // pred_check
      _
    $region31: #{tpu_custom_call.1} parent=1 // pred_check_branch
      %58 = sbr.rel (0) target = $region33
    $region32: #{tpu_custom_call.1} parent=1 // pred_region
      %59 = dma.done [#allocation6], 256
    $region33: #{tpu_custom_call.1} parent=1 // pred_fallthru
      _
    %v61 = vld [vmem:[#allocation2] sm:$0xf]
    %v62 = vld [vmem:[#allocation5] sm:$0xf]
    %v63 = vld [vmem:[#allocation5 + $0x4] sm:$0xf]
    %v64 = vld [vmem:[%s2] sm:$0x1]
    %v66 = vlaneseq
    %v67 = vshrl.u32 %v66, 7
    %v68 = vsub.s32 0, %v67
    %v69 = vrot.slane %v64, %v68
    %v73 = vunpack.c.l.b16 %v62
    %v74 = vunpack.c.l.b16 %v63
    %v75 = vpack.c.b16 %v74, %v73
    %vm77 = vcmask 130048
    %v79 = vsel %vm77, %v61, 0
    %81 = vmatprep.subr.bf16.mxu0 0
    %82 = vmatpush1.bf16.msra.mxu0 0
    %83 = vmatprep.subr.bf16.mxu0 0
    %84 = vmatpush1.bf16.msra.mxu0 0
    %85 = vmatprep.subr.bf16.mxu0 0
    %86 = vmatpush1.bf16.msra.mxu0 0
    %87 = vmatprep.subr.bf16.mxu0 0
    %88 = vmatpush1.bf16.msra.mxu0 0
    %89 = vmatprep.subr.bf16.mxu0 0
    %90 = vmatpush1.bf16.msra.mxu0 0
    %91 = vmatprep.subr.bf16.mxu0 0
    %92 = vmatpush1.bf16.msra.mxu0 0
    %93 = vmatprep.subr.bf16.mxu0 0
    %94 = vmatpush1.bf16.msra.mxu0 0
    %95 = vmatprep.subr.bf16.mxu0 0
    %96 = vmatpush1.bf16.msra.mxu0 %v75
    %97 = vmatprep.subr.bf16.mxu0 0
    %98 = vmatpush2.bf16.msra.mxu0 0
    %99 = vmatprep.subr.bf16.mxu0 0
    %100 = vmatpush2.bf16.msra.mxu0 0
    %101 = vmatprep.subr.bf16.mxu0 0
    %102 = vmatpush2.bf16.msra.mxu0 0
    %103 = vmatprep.subr.bf16.mxu0 0
    %104 = vmatpush2.bf16.msra.mxu0 0
    %105 = vmatprep.subr.bf16.mxu0 0
    %106 = vmatpush2.bf16.msra.mxu0 0
    %107 = vmatprep.subr.bf16.mxu0 0
    %108 = vmatpush2.bf16.msra.mxu0 0
    %109 = vmatprep.subr.bf16.mxu0 0
    %110 = vmatpush2.bf16.msra.mxu0 0
    %111 = vmatprep.subr.bf16.mxu0 0
    %112 = vmatpush2.bf16.msra.mxu0 0
    %113 = vmatprep.mubr.bf16.mxu0 0
    %114 = vmatmul.mubr.bf16.gmra.mxu0 %v79
    %v115 = vpop.f32.mrf.mxu0
    %v116 = vadd.f32 %v69, %v115
    %v117 = vpop.f32.mrf.mxu0
    %v118 = vpop.f32.mrf.mxu0
    %v119 = vpop.f32.mrf.mxu0
    %120 = vdwg.mxu0
    %v121 = vtanh.pop %v116
    %v122 = vpack.c.bf16 %v121, %v121
    %v123 = vld [vmem:[#allocation7] sm:$0xf]
    %v124 = vld [vmem:[#allocation7 + $0x4] sm:$0xf]
    %v125 = vld [vmem:[#allocation7 + $0x8] sm:$0xf]
    %v126 = vld [vmem:[#allocation7 + $0xc] sm:$0xf]
    %v127 = vld [vmem:[%s4] sm:$0x1]
    %v129 = vlaneseq
    %v130 = vshrl.u32 %v129, 7
    %v131 = vsub.s32 0, %v130
    %v132 = vrot.slane %v127, %v131
    %v138 = vunpack.c.l.b16 %v123
    %v139 = vunpack.c.l.b16 %v124
    %v140 = vunpack.c.l.b16 %v125
    %v141 = vunpack.c.l.b16 %v126
    %v142 = vpack.c.b16 %v139, %v138
    %v143 = vpack.c.b16 %v141, %v140
    %vm146 = vcmask 261120
    %v148 = vsel %vm146, %v122, 0
    %150 = vmatprep.subr.bf16.mxu0 0
    %151 = vmatpush1.bf16.msra.mxu0 0
    %152 = vmatprep.subr.bf16.mxu0 0
    %153 = vmatpush1.bf16.msra.mxu0 0
    %154 = vmatprep.subr.bf16.mxu0 0
    %155 = vmatpush1.bf16.msra.mxu0 0
    %156 = vmatprep.subr.bf16.mxu0 0
    %157 = vmatpush1.bf16.msra.mxu0 0
    %158 = vmatprep.subr.bf16.mxu0 0
    %159 = vmatpush1.bf16.msra.mxu0 0
    %160 = vmatprep.subr.bf16.mxu0 0
    %161 = vmatpush1.bf16.msra.mxu0 0
    %162 = vmatprep.subr.bf16.mxu0 0
    %163 = vmatpush1.bf16.msra.mxu0 %v143
    %164 = vmatprep.subr.bf16.mxu0 0
    %165 = vmatpush1.bf16.msra.mxu0 %v142
    %166 = vmatprep.subr.bf16.mxu0 0
    %167 = vmatpush2.bf16.msra.mxu0 0
    %168 = vmatprep.subr.bf16.mxu0 0
    %169 = vmatpush2.bf16.msra.mxu0 0
    %170 = vmatprep.subr.bf16.mxu0 0
    %171 = vmatpush2.bf16.msra.mxu0 0
    %172 = vmatprep.subr.bf16.mxu0 0
    %173 = vmatpush2.bf16.msra.mxu0 0
    %174 = vmatprep.subr.bf16.mxu0 0
    %175 = vmatpush2.bf16.msra.mxu0 0
    %176 = vmatprep.subr.bf16.mxu0 0
    %177 = vmatpush2.bf16.msra.mxu0 0
    %178 = vmatprep.subr.bf16.mxu0 0
    %179 = vmatpush2.bf16.msra.mxu0 0
    %180 = vmatprep.subr.bf16.mxu0 0
    %181 = vmatpush2.bf16.msra.mxu0 0
    %182 = vmatprep.mubr.bf16.mxu0 0
    %183 = vmatmul.mubr.bf16.gmra.mxu0 %v148
    %v184 = vpop.f32.mrf.mxu0
    %v185 = vadd.f32 %v132, %v184
    %v186 = vpop.f32.mrf.mxu0
    %v187 = vpop.f32.mrf.mxu0
    %v188 = vpop.f32.mrf.mxu0
    %189 = vdwg.mxu0
    %190 = vst [vmem:[#allocation8] sm:$0xff] %v185
    // Predicated region
    $region34: #{tpu_custom_call.1} parent=1 // pred_check
      _
    $region35: #{tpu_custom_call.1} parent=1 // pred_check_branch
      %192 = sbr.rel (0) target = $region37
    $region36: #{tpu_custom_call.1} parent=1 // pred_region
      %s194 = ssub.s32 128, 128
      %195 = vsyncadd [#allocation4], %s194
      %s197 = sshll.u32 [#allocation8], 4
      %s198 = int_to_ptr.vmem [resolvable:$true] %s197
      %200 = dma.vmem_to_hbm [thread:$0]  %s198, 128, %s5, [#allocation4]
    $region37: #{tpu_custom_call.1} parent=1 // pred_fallthru
      _
    // Predicated region
    $region38: #{tpu_custom_call.1} parent=1 // pred_check
      _
    $region39: #{tpu_custom_call.1} parent=1 // pred_check_branch
      %202 = sbr.rel (0) target = $region41
    $region40: #{tpu_custom_call.1} parent=1 // pred_region
      %203 = dma.done [#allocation4], 128
    $region41: #{tpu_custom_call.1} parent=1 // pred_fallthru
      _
    %204 = vsyncpa [#allocation3], 1
    %205 = vsyncpa [#allocation6], 1
    %206 = vsyncpa [#allocation4], 1

</llo_original>
